<compile_context>
chip_gen: v7x
topology: tpu7x:2x2x1
jax: 0.10.0
libtpu: 0.0.40
codegen_flags: <defaults>
</compile_context>

<pallas_src>
import functools

import jax
import jax.numpy as jnp
from jax import lax
from jax.experimental import pallas as pl
from jax.experimental.pallas import tpu as pltpu

LANES = 128
# (4096, 128) f32 tile = 2 MiB per input per pipeline buffer -> 8 MiB of input
# buffers (2 inputs x 2 buffers), plus two (1, 128) accumulators and whatever
# element-wise temporaries Mosaic materializes.  Comfortably under the 32 MiB
# scoped-VMEM limit requested below on all generations (v5e default is 16 MiB,
# hence the explicit limit).  4096 is a multiple of 16, so bf16 inputs keep
# clean sublane packing.  On v7x this could be raised to 8192 for a few extra
# percent of HBM roofline.
MAX_BLOCK_ROWS = 4096
VMEM_LIMIT_BYTES = 32 * 1024 * 1024


def _num_tensorcores() -> int:
    """Best-effort TensorCores-per-chip count (v7x: 2).

    Falls back to 2, which is harmless on single-core parts (at most one extra
    cheap serial grid step)."""
    for attr in ("num_cores", "num_tensorcores", "cores_per_chip"):
        try:
            v = int(getattr(pltpu.get_tpu_info(), attr))
            if v >= 1:
                return v
        except Exception:
            pass
    return 2


def _dice_kernel(x_ref, t_ref, o_ref, inter_acc, sum_acc, *,
                 total_rows, block_rows, blocks_per_split, needs_mask):
    # x_ref, t_ref : (block_rows, 128) VMEM tiles (original dtype)
    # o_ref        : (1, 2) SMEM per-split partials [intersection, sum(x)+sum(t)]
    # inter_acc,
    # sum_acc      : (1, 128) f32 VMEM vector accumulators
    s = pl.program_id(0)  # TensorCore split axis ("parallel")
    j = pl.program_id(1)  # streaming reduction axis ("arbitrary")

    @pl.when(j == 0)
    def _():
        inter_acc[...] = jnp.zeros_like(inter_acc)
        sum_acc[...] = jnp.zeros_like(sum_acc)

    x = x_ref[...].astype(jnp.float32)
    t = t_ref[...].astype(jnp.float32)

    def accumulate(xv, tv):
        # Per-step sublane reduce into tiny accumulators; hidden under DMA.
        inter_acc[...] += jnp.sum(xv * tv, axis=0, keepdims=True)
        sum_acc[...] += jnp.sum(xv + tv, axis=0, keepdims=True)

    if needs_mask:
        # Only the block containing the ragged row-tail (or a clamped
        # out-of-range duplicate block of the second split) pays for the
        # iota/compare/select; all fully-valid blocks take the fast path.
        global_block = s * blocks_per_split + j
        num_valid = total_rows - global_block * block_rows

        @pl.when(num_valid >= block_rows)
        def _():
            accumulate(x, t)

        @pl.when(num_valid < block_rows)
        def _():
            row_ids = lax.broadcasted_iota(jnp.int32, (block_rows, LANES), 0)
            keep = row_ids < num_valid
            # Mask BEFORE accumulating so garbage past the logical end never
            # reaches the accumulators.
            accumulate(jnp.where(keep, x, 0.0), jnp.where(keep, t, 0.0))
    else:
        accumulate(x, t)

    @pl.when(j == pl.num_programs(1) - 1)
    def _():
        # Tiny epilogue: one vreg -> scalar per accumulator.
        o_ref[0, 0] = jnp.sum(inter_acc[...])
        o_ref[0, 1] = jnp.sum(sum_acc[...])


def dice_loss(inputs, targets, smooth=1.0):
    """Pallas TPU implementation of DiceLoss.forward."""
    x = jnp.reshape(inputs, (-1,))
    t = jnp.reshape(targets, (-1,))
    assert x.shape == t.shape, "inputs and targets must have the same #elements"
    n = x.shape[0]

    rows = n // LANES
    tail = n - rows * LANES

    # Non-lane-aligned tail (< 128 elements): sum it wrapper-side instead of
    # jnp.pad'ing the whole arrays (which would roughly double HBM traffic for
    # a purely bandwidth-bound op).
    tail_inter = 0.0
    tail_sum = 0.0
    if tail:
        xt = x[rows * LANES:].astype(jnp.float32)
        tt = t[rows * LANES:].astype(jnp.float32)
        tail_inter = jnp.sum(xt * tt)
        tail_sum = jnp.sum(xt) + jnp.sum(tt)
        x = x[: rows * LANES]
        t = t[: rows * LANES]

    if rows == 0:
        intersection = tail_inter
        total_sum = tail_sum
    else:
        x2 = x.reshape(rows, LANES)
        t2 = t.reshape(rows, LANES)

        # Large streaming tiles to amortize per-grid-step overhead; small
        # inputs use the full row extent as a single block.
        block_rows = rows if rows <= MAX_BLOCK_ROWS else MAX_BLOCK_ROWS
        num_blocks = pl.cdiv(rows, block_rows)

        # One stream per TensorCore when there is more than one block.
        num_splits = max(1, min(_num_tensorcores(), num_blocks))
        blocks_per_split = pl.cdiv(num_blocks, num_splits)

        needs_mask = (rows % block_rows != 0) or (
            num_splits * blocks_per_split != num_blocks)

        if num_splits * blocks_per_split == num_blocks:
            in_map = lambda s, j: (s * blocks_per_split + j, 0)
        else:
            # Clamp fully out-of-range block indices of the last split; their
            # contents are zeroed by the in-kernel mask.
            last_block = num_blocks - 1
            in_map = lambda s, j: (
                jnp.minimum(s * blocks_per_split + j, last_block), 0)

        kernel = functools.partial(
            _dice_kernel,
            total_rows=rows,
            block_rows=block_rows,
            blocks_per_split=blocks_per_split,
            needs_mask=needs_mask,
        )

        total_elems = rows * LANES
        bytes_accessed = (
            total_elems * x2.dtype.itemsize + total_elems * t2.dtype.itemsize)

        partials = pl.pallas_call(
            kernel,
            out_shape=jax.ShapeDtypeStruct((num_splits, 2), jnp.float32),
            grid_spec=pltpu.PrefetchScalarGridSpec(
                num_scalar_prefetch=0,
                grid=(num_splits, blocks_per_split),
                in_specs=[
                    pl.BlockSpec((block_rows, LANES), in_map),
                    pl.BlockSpec((block_rows, LANES), in_map),
                ],
                out_specs=pl.BlockSpec(
                    (1, 2), lambda s, j: (s, 0), memory_space=pltpu.SMEM
                ),
                scratch_shapes=[
                    pltpu.VMEM((1, LANES), jnp.float32),
                    pltpu.VMEM((1, LANES), jnp.float32),
                ],
            ),
            compiler_params=pltpu.CompilerParams(
                dimension_semantics=("parallel", "arbitrary"),
                vmem_limit_bytes=VMEM_LIMIT_BYTES,
            ),
            cost_estimate=pl.CostEstimate(
                flops=3 * total_elems,
                transcendentals=0,
                bytes_accessed=bytes_accessed,
            ),
        )(x2, t2)

        intersection = jnp.sum(partials[:, 0]) + tail_inter
        total_sum = jnp.sum(partials[:, 1]) + tail_sum

    dice = (2.0 * intersection + smooth) / (total_sum + smooth)
    return 1.0 - dice


def _dice_loss_ref(inputs, targets, smooth=1.0):
    x = jnp.reshape(inputs, (-1,)).astype(jnp.float32)
    t = jnp.reshape(targets, (-1,)).astype(jnp.float32)
    inter = jnp.sum(x * t)
    dice = (2.0 * inter + smooth) / (jnp.sum(x) + jnp.sum(t) + smooth)
    return 1.0 - dice


if __name__ == "__main__":
    key = jax.random.PRNGKey(0)
    k1, k2 = jax.random.split(key)
    # shapes consistent with a segmentation-style use: NCHW = (2, 4, 16, 16)
    inputs = jax.nn.sigmoid(jax.random.normal(k1, (2, 4, 16, 16), jnp.float32))
    targets = (jax.random.uniform(k2, (2, 4, 16, 16)) > 0.5).astype(jnp.float32)

    loss = jax.block_until_ready(jax.jit(dice_loss)(inputs, targets))
    ref = jax.block_until_ready(_dice_loss_ref(inputs, targets, smooth=1.0))

    assert jnp.allclose(loss, ref, rtol=1e-5, atol=1e-5), (loss, ref)
    print("KERNEL_OK")
</pallas_src>

<mosaic_0001>
module attributes {stable_mosaic.version = 11 : i64} {
  func.func @_dice_kernel(%arg0: i32, %arg1: i32, %arg2: memref<16x128xf32, #tpu.memory_space<vmem>>, %arg3: memref<16x128xf32, #tpu.memory_space<vmem>>, %arg4: memref<1x2xf32, #tpu.memory_space<smem>>, %arg5: memref<1x128xf32, #tpu.memory_space<vmem>>, %arg6: memref<1x128xf32, #tpu.memory_space<vmem>>) attributes {dimension_semantics = [#tpu.dimension_semantics<parallel>, #tpu.dimension_semantics<arbitrary>], iteration_bounds = array<i64: 1, 1>, scalar_prefetch = 0 : i64, scratch_operands = 2 : i64, tpu.core_type = #tpu.core_type<tc>, window_params = [{transform_indices = @transform_0, window_bounds = array<i64: 16, 128>}, {transform_indices = @transform_1, window_bounds = array<i64: 16, 128>}, {transform_indices = @transform_2, window_bounds = array<i64: 1, 2>}]} {
    %c0_i32 = arith.constant 0 : i32
    %0 = arith.cmpi eq, %arg1, %c0_i32 : i32
    %1 = arith.extui %0 : i1 to i32
    %c0_i32_0 = arith.constant 0 : i32
    %2 = arith.cmpi ne, %1, %c0_i32_0 : i32
    scf.if %2 {
      %cst_15 = arith.constant 0.000000e+00 : f32
      %20 = vector.broadcast %cst_15 : f32 to vector<1x128xf32>
      %c0_16 = arith.constant 0 : index
      %c0_17 = arith.constant 0 : index
      %21 = vector.load %arg5[%c0_16, %c0_17] : memref<1x128xf32, #tpu.memory_space<vmem>>, vector<1x128xf32>
      tpu.vector_store %arg5[%c0_16, %c0_17], %20 {strides = array<i32>} : memref<1x128xf32, #tpu.memory_space<vmem>>, vector<1x128xf32>,
      %cst_18 = arith.constant 0.000000e+00 : f32
      %22 = vector.broadcast %cst_18 : f32 to vector<1x128xf32>
      %c0_19 = arith.constant 0 : index
      %c0_20 = arith.constant 0 : index
      %23 = vector.load %arg6[%c0_19, %c0_20] : memref<1x128xf32, #tpu.memory_space<vmem>>, vector<1x128xf32>
      tpu.vector_store %arg6[%c0_19, %c0_20], %22 {strides = array<i32>} : memref<1x128xf32, #tpu.memory_space<vmem>>, vector<1x128xf32>,
    } else {
    }
    %c0 = arith.constant 0 : index
    %c0_1 = arith.constant 0 : index
    %3 = vector.load %arg2[%c0, %c0_1] : memref<16x128xf32, #tpu.memory_space<vmem>>, vector<16x128xf32>
    %c0_2 = arith.constant 0 : index
    %c0_3 = arith.constant 0 : index
    %4 = vector.load %arg3[%c0_2, %c0_3] : memref<16x128xf32, #tpu.memory_space<vmem>>, vector<16x128xf32>
    %c0_4 = arith.constant 0 : index
    %c0_5 = arith.constant 0 : index
    %5 = vector.load %arg5[%c0_4, %c0_5] : memref<1x128xf32, #tpu.memory_space<vmem>>, vector<1x128xf32>
    %6 = arith.mulf %3, %4 : vector<16x128xf32>
    %cst = arith.constant dense<0.000000e+00> : vector<128xf32>
    %7 = vector.multi_reduction <add>, %6, %cst [0] : vector<16x128xf32> to vector<128xf32>
    %8 = vector.shape_cast %7 : vector<128xf32> to vector<1x128xf32>
    %9 = arith.addf %5, %8 : vector<1x128xf32>
    %c0_6 = arith.constant 0 : index
    %c0_7 = arith.constant 0 : index
    %10 = vector.load %arg5[%c0_6, %c0_7] : memref<1x128xf32, #tpu.memory_space<vmem>>, vector<1x128xf32>
    tpu.vector_store %arg5[%c0_6, %c0_7], %9 {strides = array<i32>} : memref<1x128xf32, #tpu.memory_space<vmem>>, vector<1x128xf32>,
    %c0_8 = arith.constant 0 : index
    %c0_9 = arith.constant 0 : index
    %11 = vector.load %arg6[%c0_8, %c0_9] : memref<1x128xf32, #tpu.memory_space<vmem>>, vector<1x128xf32>
    %12 = arith.addf %3, %4 : vector<16x128xf32>
    %cst_10 = arith.constant dense<0.000000e+00> : vector<128xf32>
    %13 = vector.multi_reduction <add>, %12, %cst_10 [0] : vector<16x128xf32> to vector<128xf32>
    %14 = vector.shape_cast %13 : vector<128xf32> to vector<1x128xf32>
    %15 = arith.addf %11, %14 : vector<1x128xf32>
    %c0_11 = arith.constant 0 : index
    %c0_12 = arith.constant 0 : index
    %16 = vector.load %arg6[%c0_11, %c0_12] : memref<1x128xf32, #tpu.memory_space<vmem>>, vector<1x128xf32>
    tpu.vector_store %arg6[%c0_11, %c0_12], %15 {strides = array<i32>} : memref<1x128xf32, #tpu.memory_space<vmem>>, vector<1x128xf32>,
    %c0_i32_13 = arith.constant 0 : i32
    %17 = arith.cmpi eq, %arg1, %c0_i32_13 : i32
    %18 = arith.extui %17 : i1 to i32
    %c0_i32_14 = arith.constant 0 : i32
    %19 = arith.cmpi ne, %18, %c0_i32_14 : i32
    scf.if %19 {
      %c0_15 = arith.constant 0 : index
      %c0_16 = arith.constant 0 : index
      %20 = vector.load %arg5[%c0_15, %c0_16] : memref<1x128xf32, #tpu.memory_space<vmem>>, vector<1x128xf32>
      %21 = vector.shape_cast %20 : vector<1x128xf32> to vector<1x1x128xf32>
      %cst_17 = arith.constant dense<0.000000e+00> : vector<1xf32>
      %22 = vector.multi_reduction <add>, %21, %cst_17 [1, 2] : vector<1x1x128xf32> to vector<1xf32>
      %23 = vector.shape_cast %22 : vector<1xf32> to vector<1x1x1xf32>
      %24 = vector.extract %23[0, 0, 0] : f32 from vector<1x1x1xf32>
      %c0_18 = arith.constant 0 : index
      %c0_19 = arith.constant 0 : index
      %25 = memref.load %arg4[%c0_18, %c0_19] : memref<1x2xf32, #tpu.memory_space<smem>>
      memref.store %24, %arg4[%c0_18, %c0_19] : memref<1x2xf32, #tpu.memory_space<smem>>
      %c0_20 = arith.constant 0 : index
      %c0_21 = arith.constant 0 : index
      %26 = vector.load %arg6[%c0_20, %c0_21] : memref<1x128xf32, #tpu.memory_space<vmem>>, vector<1x128xf32>
      %27 = vector.shape_cast %26 : vector<1x128xf32> to vector<1x1x128xf32>
      %cst_22 = arith.constant dense<0.000000e+00> : vector<1xf32>
      %28 = vector.multi_reduction <add>, %27, %cst_22 [1, 2] : vector<1x1x128xf32> to vector<1xf32>
      %29 = vector.shape_cast %28 : vector<1xf32> to vector<1x1x1xf32>
      %30 = vector.extract %29[0, 0, 0] : f32 from vector<1x1x1xf32>
      %c0_23 = arith.constant 0 : index
      %c1 = arith.constant 1 : index
      %31 = memref.load %arg4[%c0_23, %c1] : memref<1x2xf32, #tpu.memory_space<smem>>
      memref.store %30, %arg4[%c0_23, %c1] : memref<1x2xf32, #tpu.memory_space<smem>>
    } else {
    }
    return
  }
  func.func @transform_0(%arg0: i32, %arg1: i32) -> (i32, i32) {
    %c1_i32 = arith.constant 1 : i32
    %0 = arith.muli %arg0, %c1_i32 : i32
    %1 = arith.addi %0, %arg1 : i32
    %c0_i32 = arith.constant 0 : i32
    %c0_i32_0 = arith.constant 0 : i32
    return %1, %c0_i32 : i32, i32
  }
  func.func @transform_1(%arg0: i32, %arg1: i32) -> (i32, i32) {
    %c1_i32 = arith.constant 1 : i32
    %0 = arith.muli %arg0, %c1_i32 : i32
    %1 = arith.addi %0, %arg1 : i32
    %c0_i32 = arith.constant 0 : i32
    %c0_i32_0 = arith.constant 0 : i32
    return %1, %c0_i32 : i32, i32
  }
  func.func @transform_2(%arg0: i32, %arg1: i32) -> (i32, i32) {
    %c0_i32 = arith.constant 0 : i32
    %c0_i32_0 = arith.constant 0 : i32
    return %arg0, %c0_i32 : i32, i32
  }
}

</mosaic_0001>

<llo_original>
// kernel: dice_loss.1
$region0: #{dice_loss.1}
  #allocation0 [shape = 'u32[]', space=smem, size = 0x4, offset = 0x4, fixed_abs, tag = 'smem constant byte address 0x4 - core index']
  #allocation1 [shape = 'u32[144,128]{1,0:T(1,128)}', space=vmem, size = 0x12000, scoped, tag = 'internal scratch']
  #allocation2 [shape = 'f32[1,128]{1,0:T(1,128)}', space=vmem, size = 0x200, scoped, tag = 'scratch operand']
  #allocation3 [shape = 'f32[1,128]{1,0:T(1,128)}', space=vmem, size = 0x200, scoped, tag = 'scratch operand']
  %s0 = inlined_call_operand.vmem [shape: f32[16,128], index: 0, kind: input, shape index: {}]
  %s1 = inlined_call_operand.vmem [shape: f32[16,128], index: 1, kind: input, shape index: {}]
  %s2 = inlined_call_operand.vmem [shape: f32[1,2], index: 2, kind: output, shape index: {}]
  %s3 = sld [smem:[#allocation0]]
  $region26: #{dice_loss.1} parent=0
    _
  %s5 = ssub.s32 1, %s3
  %s6 = scalar_select 0, %s5, %s3
  $region1: #{dice_loss.1} parent=0
    #allocation4 [shape = 'u8[512]{0}', space=smem, size = 0x200, scoped, tag = 'output window, operand 0, single buffered']
    #allocation5 [shape = 's32[1]{0}', space=sflag, size = 0x4, scoped, tag = 'scoped memory for dice_loss.1']
    %7 = vsyncpa [#allocation5], 0
    // Predicated region
    $region2: #{dice_loss.1} parent=1 // pred_check
      _
    $region3: #{dice_loss.1} parent=1 // pred_check_branch
      %9 = sbr.rel (0) target = $region5
    $region4: #{dice_loss.1} parent=1 // pred_region
      %s10 = sadd.s32 0, 0
      %s11 = smul.u32 2, %s10
      %p12 = scmp.lt.s32.totalorder %s11, 1
      %s13 = scalar_select %p12, %s11, 1
      %s14 = smul.addr %s13, 8
      %s15 = scalar_lea.vmem %s0, %s14
      %s16 = sadd.s32 0, 0
      %s17 = smul.u32 2, %s16
    $region5: #{dice_loss.1} parent=1 // pred_fallthru
      _
    // Predicated region
    $region6: #{dice_loss.1} parent=1 // pred_check
      _
    $region7: #{dice_loss.1} parent=1 // pred_check_branch
      %19 = sbr.rel (0) target = $region9
    $region8: #{dice_loss.1} parent=1 // pred_region
      %s20 = sadd.s32 0, 0
      %s21 = smul.u32 2, %s20
      %p22 = scmp.lt.s32.totalorder %s21, 1
      %s23 = scalar_select %p22, %s21, 1
      %s24 = smul.addr %s23, 8
      %s25 = scalar_lea.vmem %s1, %s24
      %s26 = sadd.s32 0, 0
      %s27 = smul.u32 2, %s26
    $region9: #{dice_loss.1} parent=1 // pred_fallthru
      _
    %s28 = sadd.s32 0, 0
    %s29 = smul.u32 2, %s28
    %p30 = scmp.lt.s32.totalorder %s29, 1
    %s31 = scalar_select %p30, %s29, 1
    %s32 = smul.addr %s31, 8
    %s33 = scalar_lea.vmem %s0, %s32
    %s34 = sadd.s32 0, 0
    %s35 = smul.u32 2, %s34
    %p36 = scmp.lt.s32.totalorder %s35, 1
    %s37 = scalar_select %p36, %s35, 1
    %s38 = smul.addr %s37, 8
    %s39 = scalar_lea.vmem %s1, %s38
    %s40 = sadd.s32 0, 0
    %s41 = smul.u32 2, %s40
    %p42 = scmp.lt.s32.totalorder %s41, 1
    %s43 = scalar_select %p42, %s41, 1
    %s44 = smul.addr %s43, 8
    %s45 = scalar_lea.vmem %s0, %s44
    %s46 = sadd.s32 0, 0
    %s47 = smul.u32 2, %s46
    %s48 = sadd.s32 0, 0
    %s49 = smul.u32 2, %s48
    %p50 = scmp.lt.s32.totalorder %s49, 1
    %s51 = scalar_select %p50, %s49, 1
    %s52 = smul.addr %s51, 8
    %s53 = scalar_lea.vmem %s1, %s52
    %s54 = sadd.s32 0, 0
    %s55 = smul.u32 2, %s54
    %p56 = scmp.eq.s32.totalorder 0, 0
    // Predicated region
    $region10: #{dice_loss.1} parent=1 // pred_check
      %p57 = pneg %p56
    $region11: #{dice_loss.1} parent=1 // pred_check_branch
      %59 = sbr.rel (%p57) target = $region13
    $region12: #{dice_loss.1} parent=1 // pred_region
      %60 = vst [vmem:[#allocation2] sm:$0x1] 0.0
      %61 = vst [vmem:[#allocation3] sm:$0x1] 0.0
    $region13: #{dice_loss.1} parent=1 // pred_fallthru
      _
    %v62 = vld [vmem:[%s45] sm:$0xff]
    %v63 = vld [vmem:[%s45 + $0x8] sm:$0xff]
    %v64 = vld [vmem:[%s53] sm:$0xff]
    %v65 = vld [vmem:[%s53 + $0x8] sm:$0xff]
    %v66 = vld [vmem:[#allocation2] sm:$0x1]
    %v67 = vmul.f32 %v62, %v64
    %v68 = vmul.f32 %v63, %v65
    %v69 = vadd.f32 %v67, %v68
    %v70 = vrot.slane %v69, 4
    %v71 = vadd.f32 %v69, %v70
    %v72 = vrot.slane %v71, 2
    %v73 = vadd.f32 %v71, %v72
    %v74 = vrot.slane %v73, 1
    %v75 = vadd.f32 %v73, %v74
    %v76 = vadd.f32 %v66, %v75
    %77 = vst [vmem:[#allocation2] sm:$0x1] %v76
    %v78 = vld [vmem:[#allocation3] sm:$0x1]
    %v79 = vadd.f32 %v62, %v64
    %v80 = vadd.f32 %v63, %v65
    %v81 = vadd.f32 %v79, %v80
    %v82 = vrot.slane %v81, 4
    %v83 = vadd.f32 %v81, %v82
    %v84 = vrot.slane %v83, 2
    %v85 = vadd.f32 %v83, %v84
    %v86 = vrot.slane %v85, 1
    %v87 = vadd.f32 %v85, %v86
    %v88 = vadd.f32 %v78, %v87
    %89 = vst [vmem:[#allocation3] sm:$0x1] %v88
    // Predicated region
    $region14: #{dice_loss.1} parent=1 // pred_check
      %p90 = pneg %p56
    $region15: #{dice_loss.1} parent=1 // pred_check_branch
      %92 = sbr.rel (%p90) target = $region17
    $region16: #{dice_loss.1} parent=1 // pred_region
      %v93 = vld [vmem:[#allocation2] sm:$0x1]
      %vm94 = vcmask 1040384
      %v95 = vsel %vm94, %v93, 0.0
      %96 = vadd.xlane.f32.xlu0 %v95
      %v97 = vpop.xlane.xlu0 %96
      %v98 = vrot.slane %v97, 4
      %v99 = vadd.f32 %v97, %v98
      %v100 = vrot.slane %v99, 2
      %v101 = vadd.f32 %v99, %v100
      %v102 = vrot.slane %v101, 1
      %v103 = vadd.f32 %v101, %v102
      %s104 = vtos %v103
      %s105 = scalar_lea.smem [#allocation4], 0
      %106 = sst [smem:[%s105]] %s104
      %v107 = vld [vmem:[#allocation3] sm:$0x1]
      %v108 = vsel %vm94, %v107, 0.0
      %109 = vadd.xlane.f32.xlu0 %v108
      %v110 = vpop.xlane.xlu0 %109
      %v111 = vrot.slane %v110, 4
      %v112 = vadd.f32 %v110, %v111
      %v113 = vrot.slane %v112, 2
      %v114 = vadd.f32 %v112, %v113
      %v115 = vrot.slane %v114, 1
      %v116 = vadd.f32 %v114, %v115
      %s117 = vtos %v116
      %s118 = scalar_lea.smem [#allocation4], 1
      %119 = sst [smem:[%s118]] %s117
    $region17: #{dice_loss.1} parent=1 // pred_fallthru
      _
    // Predicated region
    $region18: #{dice_loss.1} parent=1 // pred_check
      _
    $region19: #{dice_loss.1} parent=1 // pred_check_branch
      %121 = sbr.rel (0) target = $region21
    $region20: #{dice_loss.1} parent=1 // pred_region
      %s123 = ssub.s32 16, 16
      %124 = vsyncadd [#allocation5], %s123
      %s126 = sshll.u32 %s2, 4
      %s127 = int_to_ptr.vmem [resolvable:$true] %s126
      %129 = dma.smem_to_vmem [#allocation4], 16, %s127, [#allocation5]
    $region21: #{dice_loss.1} parent=1 // pred_fallthru
      _
    // Predicated region
    $region22: #{dice_loss.1} parent=1 // pred_check
      _
    $region23: #{dice_loss.1} parent=1 // pred_check_branch
      %131 = sbr.rel (0) target = $region25
    $region24: #{dice_loss.1} parent=1 // pred_region
      %132 = dma.done [#allocation5], 16
    $region25: #{dice_loss.1} parent=1 // pred_fallthru
      _
    %133 = sfence
    %134 = vsyncpa [#allocation5], 1

</llo_original>
